<compile_context>
chip_gen: v7x
topology: tpu7x:2x2x1
jax: 0.10.0
libtpu: 0.0.40
codegen_flags: <defaults>
</compile_context>

<pallas_src>
from functools import partial

import jax
import jax.numpy as jnp
from jax.experimental import pallas as pl
from jax.experimental.pallas import tpu as pltpu


# ----------------------- fused conv3x3 Pallas kernel -------------------------

def conv2d_3x3_nhwc_pallas(x_nhwc, weight, bias, *, single_buffer_consts=True):
    """3x3 SAME-padding conv (stride 1) with im2col + column halo fused in-kernel.

    x_nhwc : (B, H, W, Cin)    float32 (cast to bf16 for the MXU operands)
    weight : (Cout, Cin, 3, 3) float32 (PyTorch Conv2d OIHW layout)
    bias   : (Cout,)           float32
    returns: (B, H, W, Cout)   float32
    """
    B, H, W, Cin = x_nhwc.shape
    Cout, Cin_w, KH, KW = weight.shape
    assert (KH, KW) == (3, 3) and Cin_w == Cin, "kernel written for 3x3 / pad=1"

    lane_in = W * Cin            # contraction width of one image row
    lane_out = W * Cout          # lane width of one output row

    # Shape-specialization guards (review): lane-dense unmasked stores and
    # full-sublane output tiles only hold for these shapes; fail loudly.
    assert lane_out % 128 == 0, "W*Cout must be a multiple of 128 (lane-dense stores)"
    assert H % 8 == 0, "H must be a multiple of 8 (full-sublane output tiles)"

    # ---- prep: ONE fused XLA pass (f32->bf16 convert + row zero-pad) ----
    # Channels-last means no NCHW<->NHWC transposes; folding (W, Cin) into the
    # lane axis is a free minor-dim reshape.  Only rows are zero-padded; the
    # column halo is baked into the banded weights below.
    x_bf16 = x_nhwc.astype(jnp.bfloat16)
    x_pad = jnp.pad(x_bf16, ((0, 0), (1, 1), (0, 0), (0, 0)))
    x2d = x_pad.reshape(B, H + 2, lane_in)                     # (B, H+2, W*Cin)

    # ---- dw-merged banded weights: one (W*Cin, W*Cout) matrix per dh ----
    # W_dh[w_in*Cin+ci, w_out*Cout+co] = weight[co, ci, dh, w_in - w_out + 1]
    # (zero outside the 3-wide band), so a single (H, W*Cin) x (W*Cin, W*Cout)
    # matmul applies all three dw taps of row (r+dh-1) to every output column,
    # including the zero column halo at w_out = 0 and W-1.
    taps = []
    for dh in range(KH):
        w_dh = jnp.zeros((lane_in, lane_out), jnp.float32)
        for dw in range(KW):
            band = jnp.eye(W, W, k=1 - dw, dtype=jnp.float32)   # w_in = w_out + dw - 1
            w_dh = w_dh + jnp.kron(band, weight[:, :, dh, dw].astype(jnp.float32).T)
        taps.append(w_dh)
    w_all = jnp.stack(taps).astype(jnp.bfloat16)                # (3, W*Cin, W*Cout)
    bias_lane = jnp.tile(bias.astype(jnp.float32), (W,)).reshape(1, lane_out)

    def kernel(x_ref, w_ref, b_ref, o_ref):
        # x_ref: (1, H+2, W*Cin)    bf16  row-padded image of this batch element
        # w_ref: (3, W*Cin, W*Cout) bf16  dw-merged banded taps (VMEM resident)
        # b_ref: (1, W*Cout)        f32
        # o_ref: (1, H, W*Cout)     f32   lane-dense, unmasked stores
        acc = jnp.zeros((H, lane_out), jnp.float32)
        for dh in range(KH):        # static unroll; straight accumulate chain
            acc = acc + jnp.dot(    # (v7x MRB-friendly), f32 accumulation
                x_ref[0, pl.ds(dh, H), :], w_ref[dh],
                preferred_element_type=jnp.float32)
        o_ref[0] = (acc + b_ref[...]).astype(o_ref.dtype)       # f32 epilogue

    # Constant-index weight/bias blocks: request single buffering (their
    # index_maps are constant; default double-buffering only wastes VMEM).
    const_kw = dict(pipeline_mode=pl.Buffered(1)) if single_buffer_consts else {}

    flops = 2 * B * H * W * Cout * Cin * KH * KW                # true conv FLOPs
    bytes_accessed = ((x2d.size + w_all.size) * 2               # bf16 in
                      + (bias_lane.size + B * H * lane_out) * 4)  # f32 bias/out

    out2d = pl.pallas_call(
        kernel,
        out_shape=jax.ShapeDtypeStruct((B, H, lane_out), jnp.float32),
        grid=(B,),
        in_specs=[
            pl.BlockSpec((1, H + 2, lane_in), lambda b: (b, 0, 0)),
            pl.BlockSpec((KH, lane_in, lane_out), lambda b: (0, 0, 0), **const_kw),
            pl.BlockSpec((1, lane_out), lambda b: (0, 0), **const_kw),
        ],
        out_specs=pl.BlockSpec((1, H, lane_out), lambda b: (b, 0, 0)),
        compiler_params=pltpu.CompilerParams(
            dimension_semantics=("parallel",)),
        cost_estimate=pl.CostEstimate(flops=flops, transcendentals=0,
                                      bytes_accessed=bytes_accessed),
    )(x2d, w_all, bias_lane)

    # (B, H, W*Cout) -> (B, H, W, Cout): splits the minor dim, no HBM pass.
    return out2d.reshape(B, H, W, Cout)


# --------------------------- GAFWrapper (forward) ----------------------------

class GAFWrapperJax:
    """JAX/Pallas analogue of GAFWrapper.forward.

    forward semantics:
      - if gradient filtering is disabled, or the input is 1-D / batch == 1:
        return net(inp) directly.
      - otherwise go through the GAF custom Function, whose *forward* output
        is numerically identical to net(inp) (per-sample replicated params +
        vmap); only the backward pass differs.
    """

    def __init__(self, net_apply, filter_distance_thres=0.97,
                 filter_gradients=True, exclude_from_filtering=()):
        self.net_apply = net_apply
        self.filter_distance_thres = filter_distance_thres
        self.filter_gradients = filter_gradients
        self.exclude_from_filtering = set(exclude_from_filtering)
        # TODO(synk): GAF's backward (per-sample cosine-sim distance, neighbor
        # agreement mask, renormalised per-sample param grads) is a custom-VJP
        # concern and is intentionally not part of this forward kernel.

    def __call__(self, inp_tensor):
        only_one_dim_or_no_batch = (inp_tensor.ndim == 1
                                    or inp_tensor.shape[0] == 1)
        if not self.filter_gradients or only_one_dim_or_no_batch:
            return self.net_apply(inp_tensor)
        # GAF path: forward output == net(inp); only backward differs.
        return self.net_apply(inp_tensor)


# --------------------------------- main --------------------------------------

if __name__ == "__main__":
    key = jax.random.PRNGKey(0)
    k_x, k_w, k_b = jax.random.split(key, 3)

    # Small shapes consistent with a Conv2d(4 -> 8, 3x3, pad=1) wrapped net.
    # Activations are kept channels-last (NHWC) end-to-end so the kernel I/O
    # stays lane-dense and no NCHW<->NHWC HBM transposes are needed (review
    # item); this is the module's (B, Cin, H, W) = (2, 4, 16, 16) tensor in
    # channels-last layout.
    B, H, W, Cin = 2, 16, 16, 4
    Cout, KH, KW = 8, 3, 3

    x = jax.random.normal(k_x, (B, H, W, Cin), dtype=jnp.float32)

    fan_in = Cin * KH * KW
    bound = 1.0 / float(fan_in) ** 0.5
    weight = jax.random.uniform(k_w, (Cout, Cin, KH, KW),
                                minval=-bound, maxval=bound, dtype=jnp.float32)
    bias = jax.random.uniform(k_b, (Cout,),
                              minval=-bound, maxval=bound, dtype=jnp.float32)

    def build_model(single_buffer_consts):
        net_apply = partial(conv2d_3x3_nhwc_pallas, weight=weight, bias=bias,
                            single_buffer_consts=single_buffer_consts)
        return GAFWrapperJax(net_apply, filter_distance_thres=0.97,
                             filter_gradients=True)

    try:
        out = jax.block_until_ready(build_model(True)(x))
    except Exception:
        # Fallback if this Pallas build rejects pl.Buffered(1) on a
        # pallas_call BlockSpec: identical math, default double-buffering
        # (costs ~+50 KB VMEM for the constant weight block at this shape).
        out = jax.block_until_ready(build_model(False)(x))

    assert out.shape == (B, H, W, Cout), out.shape

    # Reference: XLA SAME-padding conv in f32.  The kernel uses bf16 MXU
    # operands with f32 accumulation, hence the loosened tolerance.
    ref = jax.lax.conv_general_dilated(
        x, weight, window_strides=(1, 1), padding="SAME",
        dimension_numbers=("NHWC", "OIHW", "NHWC"),
    ) + bias.reshape(1, 1, 1, Cout)
    max_err = float(jnp.max(jnp.abs(out - ref)))
    assert jnp.allclose(out, ref, atol=3e-2, rtol=3e-2), max_err

    print("KERNEL_OK")
</pallas_src>

<mosaic_0001>
module attributes {stable_mosaic.version = 11 : i64} {
  func.func @kernel(%arg0: i32, %arg1: memref<1x18x64xbf16, #tpu.memory_space<vmem>>, %arg2: memref<3x64x128xbf16, #tpu.memory_space<vmem>>, %arg3: memref<1x128xf32, #tpu.memory_space<vmem>>, %arg4: memref<1x16x128xf32, #tpu.memory_space<vmem>>) attributes {dimension_semantics = [#tpu.dimension_semantics<parallel>], iteration_bounds = array<i64: 2>, scalar_prefetch = 0 : i64, scratch_operands = 0 : i64, tpu.core_type = #tpu.core_type<tc>, window_params = [{transform_indices = @transform_0, window_bounds = array<i64: 1, 18, 64>}, {pipeline_mode = #tpu.pipeline_mode<synchronous>, transform_indices = @transform_1, window_bounds = array<i64: 3, 64, 128>}, {pipeline_mode = #tpu.pipeline_mode<synchronous>, transform_indices = @transform_2, window_bounds = array<i64: 1, 128>}, {transform_indices = @transform_3, window_bounds = array<i64: 1, 16, 128>}]} {
    %cst = arith.constant 0.000000e+00 : f32
    %0 = vector.broadcast %cst : f32 to vector<16x128xf32>
    %c0 = arith.constant 0 : index
    %c0_0 = arith.constant 0 : index
    %c0_1 = arith.constant 0 : index
    %1 = vector.load %arg1[%c0, %c0_0, %c0_1] : memref<1x18x64xbf16, #tpu.memory_space<vmem>>, vector<1x16x64xbf16>
    %2 = vector.shape_cast %1 : vector<1x16x64xbf16> to vector<16x64xbf16>
    %c0_2 = arith.constant 0 : index
    %c0_3 = arith.constant 0 : index
    %c0_4 = arith.constant 0 : index
    %3 = vector.load %arg2[%c0_2, %c0_3, %c0_4] : memref<3x64x128xbf16, #tpu.memory_space<vmem>>, vector<1x64x128xbf16>
    %4 = vector.shape_cast %3 : vector<1x64x128xbf16> to vector<64x128xbf16>
    %cst_5 = arith.constant dense<0.000000e+00> : vector<16x128xf32>
    %5 = tpu.matmul %2, %4, %cst_5 {dimension_numbers = #tpu.dot_dimension_numbers<[1], [0], [0], [1], [0, 0, 1, 1], [], []>} : vector<16x64xbf16>, vector<64x128xbf16>, vector<16x128xf32> -> vector<16x128xf32>
    %6 = arith.addf %0, %5 : vector<16x128xf32>
    %c0_6 = arith.constant 0 : index
    %c1 = arith.constant 1 : index
    %c0_7 = arith.constant 0 : index
    %7 = vector.load %arg1[%c0_6, %c1, %c0_7] : memref<1x18x64xbf16, #tpu.memory_space<vmem>>, vector<1x16x64xbf16>
    %8 = vector.shape_cast %7 : vector<1x16x64xbf16> to vector<16x64xbf16>
    %c1_8 = arith.constant 1 : index
    %c0_9 = arith.constant 0 : index
    %c0_10 = arith.constant 0 : index
    %9 = vector.load %arg2[%c1_8, %c0_9, %c0_10] : memref<3x64x128xbf16, #tpu.memory_space<vmem>>, vector<1x64x128xbf16>
    %10 = vector.shape_cast %9 : vector<1x64x128xbf16> to vector<64x128xbf16>
    %cst_11 = arith.constant dense<0.000000e+00> : vector<16x128xf32>
    %11 = tpu.matmul %8, %10, %cst_11 {dimension_numbers = #tpu.dot_dimension_numbers<[1], [0], [0], [1], [0, 0, 1, 1], [], []>} : vector<16x64xbf16>, vector<64x128xbf16>, vector<16x128xf32> -> vector<16x128xf32>
    %12 = arith.addf %6, %11 : vector<16x128xf32>
    %c0_12 = arith.constant 0 : index
    %c2 = arith.constant 2 : index
    %c0_13 = arith.constant 0 : index
    %13 = vector.load %arg1[%c0_12, %c2, %c0_13] : memref<1x18x64xbf16, #tpu.memory_space<vmem>>, vector<1x16x64xbf16>
    %14 = vector.shape_cast %13 : vector<1x16x64xbf16> to vector<16x64xbf16>
    %c2_14 = arith.constant 2 : index
    %c0_15 = arith.constant 0 : index
    %c0_16 = arith.constant 0 : index
    %15 = vector.load %arg2[%c2_14, %c0_15, %c0_16] : memref<3x64x128xbf16, #tpu.memory_space<vmem>>, vector<1x64x128xbf16>
    %16 = vector.shape_cast %15 : vector<1x64x128xbf16> to vector<64x128xbf16>
    %cst_17 = arith.constant dense<0.000000e+00> : vector<16x128xf32>
    %17 = tpu.matmul %14, %16, %cst_17 {dimension_numbers = #tpu.dot_dimension_numbers<[1], [0], [0], [1], [0, 0, 1, 1], [], []>} : vector<16x64xbf16>, vector<64x128xbf16>, vector<16x128xf32> -> vector<16x128xf32>
    %18 = arith.addf %12, %17 : vector<16x128xf32>
    %c0_18 = arith.constant 0 : index
    %c0_19 = arith.constant 0 : index
    %19 = vector.load %arg3[%c0_18, %c0_19] : memref<1x128xf32, #tpu.memory_space<vmem>>, vector<1x128xf32>
    %20 = vector.broadcast %19 : vector<1x128xf32> to vector<16x128xf32>
    %21 = arith.addf %18, %20 : vector<16x128xf32>
    %c0_20 = arith.constant 0 : index
    %c0_21 = arith.constant 0 : index
    %c0_22 = arith.constant 0 : index
    %22 = vector.load %arg4[%c0_20, %c0_21, %c0_22] : memref<1x16x128xf32, #tpu.memory_space<vmem>>, vector<1x16x128xf32>
    %23 = vector.shape_cast %22 : vector<1x16x128xf32> to vector<16x128xf32>
    %24 = vector.shape_cast %21 : vector<16x128xf32> to vector<1x16x128xf32>
    tpu.vector_store %arg4[%c0_20, %c0_21, %c0_22], %24 {strides = array<i32>} : memref<1x16x128xf32, #tpu.memory_space<vmem>>, vector<1x16x128xf32>,
    return
  }
  func.func @transform_0(%arg0: i32) -> (i32, i32, i32) {
    %c0_i32 = arith.constant 0 : i32
    %c0_i32_0 = arith.constant 0 : i32
    %c0_i32_1 = arith.constant 0 : i32
    return %arg0, %c0_i32, %c0_i32_0 : i32, i32, i32
  }
  func.func @transform_1(%arg0: i32) -> (i32, i32, i32) {
    %c0_i32 = arith.constant 0 : i32
    %c0_i32_0 = arith.constant 0 : i32
    %c0_i32_1 = arith.constant 0 : i32
    %c0_i32_2 = arith.constant 0 : i32
    return %c0_i32, %c0_i32_0, %c0_i32_1 : i32, i32, i32
  }
  func.func @transform_2(%arg0: i32) -> (i32, i32) {
    %c0_i32 = arith.constant 0 : i32
    %c0_i32_0 = arith.constant 0 : i32
    %c0_i32_1 = arith.constant 0 : i32
    return %c0_i32, %c0_i32_0 : i32, i32
  }
  func.func @transform_3(%arg0: i32) -> (i32, i32, i32) {
    %c0_i32 = arith.constant 0 : i32
    %c0_i32_0 = arith.constant 0 : i32
    %c0_i32_1 = arith.constant 0 : i32
    return %arg0, %c0_i32, %c0_i32_0 : i32, i32, i32
  }
}

module attributes {stable_mosaic.version = 11 : i64} {
  func.func @kernel(%arg0: i32, %arg1: memref<1x18x64xbf16, #tpu.memory_space<vmem>>, %arg2: memref<3x64x128xbf16, #tpu.memory_space<vmem>>, %arg3: memref<1x128xf32, #tpu.memory_space<vmem>>, %arg4: memref<1x16x128xf32, #tpu.memory_space<vmem>>) attributes {dimension_semantics = [#tpu.dimension_semantics<parallel>], iteration_bounds = array<i64: 2>, scalar_prefetch = 0 : i64, scratch_operands = 0 : i64, tpu.core_type = #tpu.core_type<tc>, window_params = [{transform_indices = @transform_0, window_bounds = array<i64: 1, 18, 64>}, {pipeline_mode = #tpu.pipeline_mode<synchronous>, transform_indices = @transform_1, window_bounds = array<i64: 3, 64, 128>}, {pipeline_mode = #tpu.pipeline_mode<synchronous>, transform_indices = @transform_2, window_bounds = array<i64: 1, 128>}, {transform_indices = @transform_3, window_bounds = array<i64: 1, 16, 128>}]} {
    %cst = arith.constant 0.000000e+00 : f32
    %0 = vector.broadcast %cst : f32 to vector<16x128xf32>
    %c0 = arith.constant 0 : index
    %c0_0 = arith.constant 0 : index
    %c0_1 = arith.constant 0 : index
    %1 = vector.load %arg1[%c0, %c0_0, %c0_1] : memref<1x18x64xbf16, #tpu.memory_space<vmem>>, vector<1x16x64xbf16>
    %2 = vector.shape_cast %1 : vector<1x16x64xbf16> to vector<16x64xbf16>
    %c0_2 = arith.constant 0 : index
    %c0_3 = arith.constant 0 : index
    %c0_4 = arith.constant 0 : index
    %3 = vector.load %arg2[%c0_2, %c0_3, %c0_4] : memref<3x64x128xbf16, #tpu.memory_space<vmem>>, vector<1x64x128xbf16>
    %4 = vector.shape_cast %3 : vector<1x64x128xbf16> to vector<64x128xbf16>
    %cst_5 = arith.constant dense<0.000000e+00> : vector<16x128xf32>
    %5 = tpu.matmul %2, %4, %cst_5 {dimension_numbers = #tpu.dot_dimension_numbers<[1], [0], [0], [1], [0, 0, 1, 1], [], []>} : vector<16x64xbf16>, vector<64x128xbf16>, vector<16x128xf32> -> vector<16x128xf32>
    %6 = arith.addf %0, %5 : vector<16x128xf32>
    %c0_6 = arith.constant 0 : index
    %c1 = arith.constant 1 : index
    %c0_7 = arith.constant 0 : index
    %7 = vector.load %arg1[%c0_6, %c1, %c0_7] : memref<1x18x64xbf16, #tpu.memory_space<vmem>>, vector<1x16x64xbf16>
    %8 = vector.shape_cast %7 : vector<1x16x64xbf16> to vector<16x64xbf16>
    %c1_8 = arith.constant 1 : index
    %c0_9 = arith.constant 0 : index
    %c0_10 = arith.constant 0 : index
    %9 = vector.load %arg2[%c1_8, %c0_9, %c0_10] : memref<3x64x128xbf16, #tpu.memory_space<vmem>>, vector<1x64x128xbf16>
    %10 = vector.shape_cast %9 : vector<1x64x128xbf16> to vector<64x128xbf16>
    %cst_11 = arith.constant dense<0.000000e+00> : vector<16x128xf32>
    %11 = tpu.matmul %8, %10, %cst_11 {dimension_numbers = #tpu.dot_dimension_numbers<[1], [0], [0], [1], [0, 0, 1, 1], [], []>} : vector<16x64xbf16>, vector<64x128xbf16>, vector<16x128xf32> -> vector<16x128xf32>
    %12 = arith.addf %6, %11 : vector<16x128xf32>
    %c0_12 = arith.constant 0 : index
    %c2 = arith.constant 2 : index
    %c0_13 = arith.constant 0 : index
    %13 = vector.load %arg1[%c0_12, %c2, %c0_13] : memref<1x18x64xbf16, #tpu.memory_space<vmem>>, vector<1x16x64xbf16>
    %14 = vector.shape_cast %13 : vector<1x16x64xbf16> to vector<16x64xbf16>
    %c2_14 = arith.constant 2 : index
    %c0_15 = arith.constant 0 : index
    %c0_16 = arith.constant 0 : index
    %15 = vector.load %arg2[%c2_14, %c0_15, %c0_16] : memref<3x64x128xbf16, #tpu.memory_space<vmem>>, vector<1x64x128xbf16>
    %16 = vector.shape_cast %15 : vector<1x64x128xbf16> to vector<64x128xbf16>
    %cst_17 = arith.constant dense<0.000000e+00> : vector<16x128xf32>
    %17 = tpu.matmul %14, %16, %cst_17 {dimension_numbers = #tpu.dot_dimension_numbers<[1], [0], [0], [1], [0, 0, 1, 1], [], []>} : vector<16x64xbf16>, vector<64x128xbf16>, vector<16x128xf32> -> vector<16x128xf32>
    %18 = arith.addf %12, %17 : vector<16x128xf32>
    %c0_18 = arith.constant 0 : index
    %c0_19 = arith.constant 0 : index
    %19 = vector.load %arg3[%c0_18, %c0_19] : memref<1x128xf32, #tpu.memory_space<vmem>>, vector<1x128xf32>
    %20 = vector.broadcast %19 : vector<1x128xf32> to vector<16x128xf32>
    %21 = arith.addf %18, %20 : vector<16x128xf32>
    %c0_20 = arith.constant 0 : index
    %c0_21 = arith.constant 0 : index
    %c0_22 = arith.constant 0 : index
    %22 = vector.load %arg4[%c0_20, %c0_21, %c0_22] : memref<1x16x128xf32, #tpu.memory_space<vmem>>, vector<1x16x128xf32>
    %23 = vector.shape_cast %22 : vector<1x16x128xf32> to vector<16x128xf32>
    %24 = vector.shape_cast %21 : vector<16x128xf32> to vector<1x16x128xf32>
    tpu.vector_store %arg4[%c0_20, %c0_21, %c0_22], %24 {strides = array<i32>} : memref<1x16x128xf32, #tpu.memory_space<vmem>>, vector<1x16x128xf32>,
    return
  }
  func.func @transform_0(%arg0: i32) -> (i32, i32, i32) {
    %c0_i32 = arith.constant 0 : i32
    %c0_i32_0 = arith.constant 0 : i32
    %c0_i32_1 = arith.constant 0 : i32
    return %arg0, %c0_i32, %c0_i32_0 : i32, i32, i32
  }
  func.func @transform_1(%arg0: i32) -> (i32, i32, i32) {
    %c0_i32 = arith.constant 0 : i32
    %c0_i32_0 = arith.constant 0 : i32
    %c0_i32_1 = arith.constant 0 : i32
    %c0_i32_2 = arith.constant 0 : i32
    return %c0_i32, %c0_i32_0, %c0_i32_1 : i32, i32, i32
  }
  func.func @transform_2(%arg0: i32) -> (i32, i32) {
    %c0_i32 = arith.constant 0 : i32
    %c0_i32_0 = arith.constant 0 : i32
    %c0_i32_1 = arith.constant 0 : i32
    return %c0_i32, %c0_i32_0 : i32, i32
  }
  func.func @transform_3(%arg0: i32) -> (i32, i32, i32) {
    %c0_i32 = arith.constant 0 : i32
    %c0_i32_0 = arith.constant 0 : i32
    %c0_i32_1 = arith.constant 0 : i32
    return %arg0, %c0_i32, %c0_i32_0 : i32, i32, i32
  }
}

</mosaic_0001>

<llo_original>
// kernel: tpu_custom_call.1
$region0: #{tpu_custom_call.1}
  #allocation0 [shape = 'u32[]', space=smem, size = 0x4, offset = 0x4, fixed_abs, tag = 'smem constant byte address 0x4 - core index']
  #allocation1 [shape = 'u32[144,128]{1,0:T(1,128)}', space=vmem, size = 0x12000, scoped, tag = 'internal scratch']
  %s0 = inlined_call_operand.vmem [shape: bf16[2,18,64], index: 0, kind: input, shape index: {}]
  %s1 = inlined_call_operand.hbm [shape: bf16[3,64,128], index: 1, kind: input, shape index: {}]
  %s2 = inlined_call_operand.vmem [shape: f32[1,128], index: 2, kind: input, shape index: {}]
  %s3 = inlined_call_operand.hbm [shape: f32[2,16,128], index: 3, kind: output, shape index: {}]
  %s4 = sld [smem:[#allocation0]]
  $region49: #{tpu_custom_call.1} parent=0
    _
  %s6 = ssub.s32 1, %s4
  %s7 = scalar_select 0, %s6, %s4
  $region1: #{tpu_custom_call.1} parent=0
    #allocation2 [shape = 'u8[49152]{0}', space=vmem, size = 0xc000, scoped, tag = 'input window, operand 1, single buffered']
    #allocation3 [shape = 's32[2]{0}', space=sflag, size = 0x8, scoped, tag = 'scoped memory for tpu_custom_call.1']
    #allocation4 [shape = 's32[2]{0}', space=sflag, size = 0x8, scoped, tag = 'scoped memory for tpu_custom_call.1']
    #allocation5 [shape = 'u8[16384]{0}', space=vmem, size = 0x4000, scoped, tag = 'output window, operand 0']
    %8 = vsyncpa [#allocation3], 0
    %9 = vsyncpa [#allocation4], 0
    %s10 = scalar_lea.sflag [#allocation4], 1
    %11 = vsyncpa %s10, 0
    loop: start=0, step=1, limit=4
    $region2: #{tpu_custom_call.1} parent=1 // loop_pre_header
      _
    $region3: #{tpu_custom_call.1} parent=1 // loop_header
      %s13 = sphi 0, %s17
      %p14 = scmp.ge.s32.totalorder %s13, 4
      %s23 = sphi 0, %s25
      %s26 = sphi 0, %s23
      %s27 = sphi 0, %s26
      %s43 = sphi 0, %s27
      %s47 = sphi 0, %s47
      %s49 = sphi 0, %s47
      %s50 = sphi 0, %s49
      %s64 = sphi 0, %s50
      %s68 = sphi 0, %s68
      %s70 = sphi 0, %s68
      %s71 = sphi 0, %s70
      %s85 = sphi 0, %s71
      %s91 = sphi 0, %s93
      %s94 = sphi 0, %s91
      %s95 = sphi 0, %s94
      %s111 = sphi 0, %s95
    $region4: #{tpu_custom_call.1} parent=1 // loop_header_branch
      %16 = sbr.rel (%p14) target = $region8
    $region5: #{tpu_custom_call.1} parent=1 // loop_body
      %s18 = ssub.s32 %s13, 1
      %s19 = ssub.s32 %s13, 2
      %s20 = sadd.s32 %s13, 1
      %s21 = ssub.s32 %s13, %s20
      %p22 = scmp.eq.s32.totalorder %s21, 0
      %s24 = sadd.s32 %s23, 1
      %s25 = scalar_select %p22, %s23, %s24
      %p28 = pneg %p22
      %p29 = scmp.eq.s32.totalorder %s13, 1
      %p30 = por %p28, %p29
      %p31 = scmp.ne.s32.totalorder %s23, %s26
      %p32 = scmp.eq.s32.totalorder %s13, 0
      %p33 = por %p31, %p32
      %p34 = scmp.ne.s32.totalorder %s23, %s26
      %p35 = scmp.eq.s32.totalorder %s18, 1
      %p36 = por %p34, %p35
      %p37 = scmp.ne.s32.totalorder %s26, %s27
      %p38 = scmp.eq.s32.totalorder %s18, 0
      %p39 = por %p37, %p38
      %p40 = scmp.ne.s32.totalorder %s26, %s27
      %p41 = scmp.eq.s32.totalorder %s19, 1
      %p42 = por %p40, %p41
      %p44 = scmp.ne.s32.totalorder %s27, %s43
      %p45 = scmp.eq.s32.totalorder %s19, 0
      %p46 = por %p44, %p45
      %s48 = sadd.s32 %s47, 1
      %p51 = scmp.eq.s32.totalorder %s13, 1
      %p52 = scmp.ne.s32.totalorder %s47, %s49
      %p53 = scmp.eq.s32.totalorder %s13, 0
      %p54 = por %p52, %p53
      %p55 = scmp.ne.s32.totalorder %s47, %s49
      %p56 = scmp.eq.s32.totalorder %s18, 1
      %p57 = por %p55, %p56
      %p58 = scmp.ne.s32.totalorder %s49, %s50
      %p59 = scmp.eq.s32.totalorder %s18, 0
      %p60 = por %p58, %p59
      %p61 = scmp.ne.s32.totalorder %s49, %s50
      %p62 = scmp.eq.s32.totalorder %s19, 1
      %p63 = por %p61, %p62
      %p65 = scmp.ne.s32.totalorder %s50, %s64
      %p66 = scmp.eq.s32.totalorder %s19, 0
      %p67 = por %p65, %p66
      %s69 = sadd.s32 %s68, 1
      %p72 = scmp.eq.s32.totalorder %s13, 1
      %p73 = scmp.ne.s32.totalorder %s68, %s70
      %p74 = scmp.eq.s32.totalorder %s13, 0
      %p75 = por %p73, %p74
      %p76 = scmp.ne.s32.totalorder %s68, %s70
      %p77 = scmp.eq.s32.totalorder %s18, 1
      %p78 = por %p76, %p77
      %p79 = scmp.ne.s32.totalorder %s70, %s71
      %p80 = scmp.eq.s32.totalorder %s18, 0
      %p81 = por %p79, %p80
      %p82 = scmp.ne.s32.totalorder %s70, %s71
      %p83 = scmp.eq.s32.totalorder %s19, 1
      %p84 = por %p82, %p83
      %p86 = scmp.ne.s32.totalorder %s71, %s85
      %p87 = scmp.eq.s32.totalorder %s19, 0
      %p88 = por %p86, %p87
      %s89 = ssub.s32 %s13, %s20
      %p90 = scmp.eq.s32.totalorder %s89, 0
      %s92 = sadd.s32 %s91, 1
      %s93 = scalar_select %p90, %s91, %s92
      %p96 = pneg %p90
      %p97 = scmp.eq.s32.totalorder %s13, 1
      %p98 = por %p96, %p97
      %p99 = scmp.ne.s32.totalorder %s91, %s94
      %p100 = scmp.eq.s32.totalorder %s13, 0
      %p101 = por %p99, %p100
      %p102 = scmp.ne.s32.totalorder %s91, %s94
      %p103 = scmp.eq.s32.totalorder %s18, 1
      %p104 = por %p102, %p103
      %p105 = scmp.ne.s32.totalorder %s94, %s95
      %p106 = scmp.eq.s32.totalorder %s18, 0
      %p107 = por %p105, %p106
      %p108 = scmp.ne.s32.totalorder %s94, %s95
      %p109 = scmp.eq.s32.totalorder %s19, 1
      %p110 = por %p108, %p109
      %p112 = scmp.ne.s32.totalorder %s95, %s111
      %p113 = scmp.eq.s32.totalorder %s19, 0
      %p114 = por %p112, %p113
      %p115 = scmp.le.s32.totalorder 1, %s13
      %p116 = scmp.lt.s32.totalorder %s13, 3
      %p117 = pnand %p115, %p116
      %p118 = pneg %p117
      // Predicated region
      $region9: #{tpu_custom_call.1} parent=5 // pred_check
        _
      $region10: #{tpu_custom_call.1} parent=5 // pred_check_branch
        %120 = sbr.rel (%p117) target = $region12
      $region11: #{tpu_custom_call.1} parent=5 // pred_region
        %s121 = ssub.s32 %s13, 1
        // Predicated region
        $region13: #{tpu_custom_call.1} parent=11 // pred_check
          %p122 = pneg %p60
        $region14: #{tpu_custom_call.1} parent=11 // pred_check_branch
          %124 = sbr.rel (%p122) target = $region16
        $region15: #{tpu_custom_call.1} parent=11 // pred_region
          %s126 = ssub.s32 1536, 1536
          %127 = vsyncadd [#allocation3], %s126
          %s128 = sshll.u32 [#allocation2], 4
          %s129 = int_to_ptr.vmem [resolvable:$true] %s128
          %134 = dma.hbm_to_vmem [thread:$0]  %s1, 1536, %s129, [#allocation3], 64, 64, 4
        $region16: #{tpu_custom_call.1} parent=11 // pred_fallthru
          _
        // Predicated region
        $region17: #{tpu_custom_call.1} parent=11 // pred_check
          %p135 = pneg %p81
        $region18: #{tpu_custom_call.1} parent=11 // pred_check_branch
          %137 = sbr.rel (%p135) target = $region20
        $region19: #{tpu_custom_call.1} parent=11 // pred_region
          _
        $region20: #{tpu_custom_call.1} parent=11 // pred_fallthru
          _
      $region12: #{tpu_custom_call.1} parent=5 // pred_fallthru
        _
      %p138 = scmp.lt.s32.totalorder %s13, 2
      // Predicated region
      $region21: #{tpu_custom_call.1} parent=5 // pred_check
        %p139 = pneg %p138
      $region22: #{tpu_custom_call.1} parent=5 // pred_check_branch
        %141 = sbr.rel (%p139) target = $region24
      $region23: #{tpu_custom_call.1} parent=5 // pred_region
        // Predicated region
        $region25: #{tpu_custom_call.1} parent=23 // pred_check
          %p142 = pneg %p33
        $region26: #{tpu_custom_call.1} parent=23 // pred_check_branch
          %144 = sbr.rel (%p142) target = $region28
        $region27: #{tpu_custom_call.1} parent=23 // pred_region
          %p145 = scmp.lt.s32.totalorder %s13, 1
          %s146 = scalar_select %p145, %s13, 1
          %s147 = smul.addr %s146, 3
          %s148 = smul.addr %s147, 4
          %s149 = scalar_lea.vmem %s0, %s148
        $region28: #{tpu_custom_call.1} parent=23 // pred_fallthru
          _
      $region24: #{tpu_custom_call.1} parent=5 // pred_fallthru
        _
      %p150 = scmp.le.s32.totalorder 1, %s13
      %p151 = scmp.lt.s32.totalorder %s13, 3
      %p152 = pnand %p150, %p151
      %p153 = pneg %p152
      // Predicated region
      $region29: #{tpu_custom_call.1} parent=5 // pred_check
        _
      $region30: #{tpu_custom_call.1} parent=5 // pred_check_branch
        %155 = sbr.rel (%p152) target = $region32
      $region31: #{tpu_custom_call.1} parent=5 // pred_region
        %s156 = ssub.s32 %s13, 1
        // Predicated region
        $region33: #{tpu_custom_call.1} parent=31 // pred_check
          %p157 = pneg %p60
        $region34: #{tpu_custom_call.1} parent=31 // pred_check_branch
          %159 = sbr.rel (%p157) target = $region36
        $region35: #{tpu_custom_call.1} parent=31 // pred_region
          %160 = dma.done [#allocation3], 1536
        $region36: #{tpu_custom_call.1} parent=31 // pred_fallthru
          _
        %p161 = scmp.lt.s32.totalorder %s18, 1
        %s162 = scalar_select %p161, %s18, 1
        %s163 = smul.addr %s162, 3
        %s164 = smul.addr %s163, 4
        %s165 = scalar_lea.vmem %s0, %s164
        %p166 = pneg %p39
        %p167 = pneg %p36
        %p168 = pneg %p60
        %p169 = pneg %p57
        %p170 = pneg %p81
        %p171 = pneg %p78
        %p172 = pneg %p107
        %p173 = pneg %p104
        %s174 = sand.u32 %s94, 1
        %s175 = scalar_lea.sflag [#allocation4], %s174
        %s176 = sand.u32 %s94, 1
        %s177 = smul.addr %s176, 16
        %s178 = scalar_lea.vmem [#allocation5], %s177
        %p179 = scmp.lt.s32.totalorder %s18, 1
        %s180 = scalar_select %p179, %s18, 1
        %s181 = smul.addr %s180, 3
        %s182 = smul.addr %s181, 4
        %s183 = scalar_lea.vmem %s0, %s182
        %v185 = vld [vmem:[%s183] sm:$0xf]
        %v186 = vld [vmem:[%s183 + $0x4] sm:$0xf]
        %v187 = vld [vmem:[#allocation2] sm:$0xf]
        %v188 = vld [vmem:[#allocation2 + $0x4] sm:$0xf]
        %v189 = vld [vmem:[#allocation2 + $0x8] sm:$0xf]
        %v190 = vld [vmem:[#allocation2 + $0xc] sm:$0xf]
        %v191 = vld [vmem:[#allocation2 + $0x10] sm:$0xf]
        %v192 = vld [vmem:[#allocation2 + $0x14] sm:$0xf]
        %v193 = vld [vmem:[#allocation2 + $0x18] sm:$0xf]
        %v194 = vld [vmem:[#allocation2 + $0x1c] sm:$0xf]
        %v195 = vld [vmem:[%s183 + $0x8] sm:$0x1]
        %s196 = scalar_lea.vmem [#allocation2], 32
        %v197 = vld [vmem:[%s196] sm:$0xf]
        %v198 = vld [vmem:[%s196 + $0x4] sm:$0xf]
        %v199 = vld [vmem:[%s196 + $0x8] sm:$0xf]
        %v200 = vld [vmem:[%s196 + $0xc] sm:$0xf]
        %v201 = vld [vmem:[%s196 + $0x10] sm:$0xf]
        %v202 = vld [vmem:[%s196 + $0x14] sm:$0xf]
        %v203 = vld [vmem:[%s196 + $0x18] sm:$0xf]
        %v204 = vld [vmem:[%s196 + $0x1c] sm:$0xf]
        %v208 = vunpack.c.l.b16 %v185
        %v209 = vunpack.c.l.b16 %v186
        %v210 = vunpack.c.l.b16 %v195
        %v211 = vpack.c.b16 %v209, %v208
        %v212 = vpack.c.b16 %v210, %v210
        %vm213 = vsmask.f32 7424
        %v215 = vshrl.u32 %v211, 16
        %v217 = vshll.u32 %v211, 16
        %v219 = vrot.slane %v217, 1
        %v220 = vor.u32 %v215, %v219
        %v222 = vshll.u32 %v212, 16
        %v224 = vrot.slane %v222, 1
        %v225 = vsel %vm213, %v220, %v224
        %v234 = vunpack.c.l.b16 %v197
        %v235 = vunpack.c.l.b16 %v198
        %v236 = vunpack.c.l.b16 %v199
        %v237 = vunpack.c.l.b16 %v200
        %v238 = vunpack.c.l.b16 %v201
        %v239 = vunpack.c.l.b16 %v202
        %v240 = vunpack.c.l.b16 %v203
        %v241 = vunpack.c.l.b16 %v204
        %v242 = vpack.c.b16 %v235, %v234
        %v243 = vpack.c.b16 %v237, %v236
        %v244 = vpack.c.b16 %v239, %v238
        %v245 = vpack.c.b16 %v241, %v240
        %vm250 = vcmask 523264
        %v252 = vsel %vm250, %v225, 0
        %254 = vmatprep.subr.bf16.mxu0 0
        %255 = vmatpush1.bf16.msra.mxu0 %v242
        %256 = vmatprep.subr.bf16.mxu0 0
        %257 = vmatpush1.bf16.msra.mxu0 %v243
        %258 = vmatprep.subr.bf16.mxu0 0
        %259 = vmatpush1.bf16.msra.mxu0 %v244
        %260 = vmatprep.subr.bf16.mxu0 0
        %261 = vmatpush1.bf16.msra.mxu0 %v245
        %262 = vmatprep.subr.bf16.mxu0 0
        %263 = vmatpush1.bf16.msra.mxu0 0
        %264 = vmatprep.subr.bf16.mxu0 0
        %265 = vmatpush1.bf16.msra.mxu0 0
        %266 = vmatprep.subr.bf16.mxu0 0
        %267 = vmatpush1.bf16.msra.mxu0 0
        %268 = vmatprep.subr.bf16.mxu0 0
        %269 = vmatpush1.bf16.msra.mxu0 0
        %270 = vmatprep.subr.bf16.mxu0 0
        %271 = vmatpush1.bf16.msra.mxu0 0
        %272 = vmatprep.subr.bf16.mxu0 0
        %273 = vmatpush1.bf16.msra.mxu0 0
        %274 = vmatprep.subr.bf16.mxu0 0
        %275 = vmatpush1.bf16.msra.mxu0 0
        %276 = vmatprep.subr.bf16.mxu0 0
        %277 = vmatpush1.bf16.msra.mxu0 0
        %278 = vmatprep.subr.bf16.mxu0 0
        %279 = vmatpush1.bf16.msra.mxu0 0
        %280 = vmatprep.subr.bf16.mxu0 0
        %281 = vmatpush1.bf16.msra.mxu0 0
        %282 = vmatprep.subr.bf16.mxu0 0
        %283 = vmatpush1.bf16.msra.mxu0 0
        %284 = vmatprep.subr.bf16.mxu0 0
        %285 = vmatpush1.bf16.msra.mxu0 0
        %286 = vmatprep.mubr.bf16.mxu0 0
        %287 = vmatmul.mubr.bf16.gmra.mrb[0].mxu0 %v252
        %v288 = vpop.f32.mrb[0].mxu0
        %v289 = vadd.f32 0.0, %v288
        %v290 = vpop.f32.mrb[0].mxu0
        %v291 = vpop.f32.mrb[0].mxu0
        %v292 = vadd.f32 0.0, %v291
        %v293 = vpop.f32.mrb[0].mxu0
        %294 = vdwg.mxu0
        %v303 = vunpack.c.l.b16 %v187
        %v304 = vunpack.c.l.b16 %v188
        %v305 = vunpack.c.l.b16 %v189
        %v306 = vunpack.c.l.b16 %v190
        %v307 = vunpack.c.l.b16 %v191
        %v308 = vunpack.c.l.b16 %v192
        %v309 = vunpack.c.l.b16 %v193
        %v310 = vunpack.c.l.b16 %v194
        %v311 = vpack.c.b16 %v304, %v303
        %v312 = vpack.c.b16 %v306, %v305
        %v313 = vpack.c.b16 %v308, %v307
        %v314 = vpack.c.b16 %v310, %v309
        %v319 = vsel %vm250, %v211, 0
        %321 = vmatprep.subr.bf16.mxu0 0
        %322 = vmatpush1.bf16.msra.mxu0 %v311
        %323 = vmatprep.subr.bf16.mxu0 0
        %324 = vmatpush1.bf16.msra.mxu0 %v312
        %325 = vmatprep.subr.bf16.mxu0 0
        %326 = vmatpush1.bf16.msra.mxu0 %v313
        %327 = vmatprep.subr.bf16.mxu0 0
        %328 = vmatpush1.bf16.msra.mxu0 %v314
        %329 = vmatprep.subr.bf16.mxu0 0
        %330 = vmatpush1.bf16.msra.mxu0 0
        %331 = vmatprep.subr.bf16.mxu0 0
        %332 = vmatpush1.bf16.msra.mxu0 0
        %333 = vmatprep.subr.bf16.mxu0 0
        %334 = vmatpush1.bf16.msra.mxu0 0
        %335 = vmatprep.subr.bf16.mxu0 0
        %336 = vmatpush1.bf16.msra.mxu0 0
        %337 = vmatprep.subr.bf16.mxu0 0
        %338 = vmatpush1.bf16.msra.mxu0 0
        %339 = vmatprep.subr.bf16.mxu0 0
        %340 = vmatpush1.bf16.msra.mxu0 0
        %341 = vmatprep.subr.bf16.mxu0 0
        %342 = vmatpush1.bf16.msra.mxu0 0
        %343 = vmatprep.subr.bf16.mxu0 0
        %344 = vmatpush1.bf16.msra.mxu0 0
        %345 = vmatprep.subr.bf16.mxu0 0
        %346 = vmatpush1.bf16.msra.mxu0 0
        %347 = vmatprep.subr.bf16.mxu0 0
        %348 = vmatpush1.bf16.msra.mxu0 0
        %349 = vmatprep.subr.bf16.mxu0 0
        %350 = vmatpush1.bf16.msra.mxu0 0
        %351 = vmatprep.subr.bf16.mxu0 0
        %352 = vmatpush1.bf16.msra.mxu0 0
        %353 = vmatprep.mubr.bf16.mxu0 0
        %354 = vmatmul.mubr.bf16.gmra.mrb[0].mxu0 %v319
        %v355 = vpop.f32.mrb[0].mxu0
        %v356 = vadd.f32 %v289, %v355
        %v357 = vpop.f32.mrb[0].mxu0
        %v358 = vpop.f32.mrb[0].mxu0
        %v359 = vadd.f32 %v292, %v358
        %v360 = vpop.f32.mrb[0].mxu0
        %361 = vdwg.mxu0
        %v362 = vld [vmem:[%s183] sm:$0xe]
        %s363 = scalar_lea.vmem [#allocation2], 64
        %v364 = vld [vmem:[%s363] sm:$0xf]
        %v365 = vld [vmem:[%s363 + $0x4] sm:$0xf]
        %v366 = vld [vmem:[%s363 + $0x8] sm:$0xf]
        %v367 = vld [vmem:[%s363 + $0xc] sm:$0xf]
        %v368 = vld [vmem:[%s363 + $0x10] sm:$0xf]
        %v369 = vld [vmem:[%s363 + $0x14] sm:$0xf]
        %v370 = vld [vmem:[%s363 + $0x18] sm:$0xf]
        %v371 = vld [vmem:[%s363 + $0x1c] sm:$0xf]
        %v373 = vunpack.c.l.b16 %v362
        %v374 = vpack.c.b16 %v209, %v373
        %vm375 = vcmask 1046528
        %v376 = vrot.slane %v374, 1
        %v377 = vrot.slane %v212, 1
        %v378 = vsel %vm375, %v376, %v377
        %v387 = vunpack.c.l.b16 %v364
        %v388 = vunpack.c.l.b16 %v365
        %v389 = vunpack.c.l.b16 %v366
        %v390 = vunpack.c.l.b16 %v367
        %v391 = vunpack.c.l.b16 %v368
        %v392 = vunpack.c.l.b16 %v369
        %v393 = vunpack.c.l.b16 %v370
        %v394 = vunpack.c.l.b16 %v371
        %v395 = vpack.c.b16 %v388, %v387
        %v396 = vpack.c.b16 %v390, %v389
        %v397 = vpack.c.b16 %v392, %v391
        %v398 = vpack.c.b16 %v394, %v393
        %v404 = vsel %vm250, %v378, 0
        %406 = vmatprep.subr.bf16.mxu0 0
        %407 = vmatpush1.bf16.msra.mxu0 %v395
        %408 = vmatprep.subr.bf16.mxu0 0
        %409 = vmatpush1.bf16.msra.mxu0 %v396
        %410 = vmatprep.subr.bf16.mxu0 0
        %411 = vmatpush1.bf16.msra.mxu0 %v397
        %412 = vmatprep.subr.bf16.mxu0 0
        %413 = vmatpush1.bf16.msra.mxu0 %v398
        %414 = vmatprep.subr.bf16.mxu0 0
        %415 = vmatpush1.bf16.msra.mxu0 0
        %416 = vmatprep.subr.bf16.mxu0 0
        %417 = vmatpush1.bf16.msra.mxu0 0
        %418 = vmatprep.subr.bf16.mxu0 0
        %419 = vmatpush1.bf16.msra.mxu0 0
        %420 = vmatprep.subr.bf16.mxu0 0
        %421 = vmatpush1.bf16.msra.mxu0 0
        %422 = vmatprep.subr.bf16.mxu0 0
        %423 = vmatpush1.bf16.msra.mxu0 0
        %424 = vmatprep.subr.bf16.mxu0 0
        %425 = vmatpush1.bf16.msra.mxu0 0
        %426 = vmatprep.subr.bf16.mxu0 0
        %427 = vmatpush1.bf16.msra.mxu0 0
        %428 = vmatprep.subr.bf16.mxu0 0
        %429 = vmatpush1.bf16.msra.mxu0 0
        %430 = vmatprep.subr.bf16.mxu0 0
        %431 = vmatpush1.bf16.msra.mxu0 0
        %432 = vmatprep.subr.bf16.mxu0 0
        %433 = vmatpush1.bf16.msra.mxu0 0
        %434 = vmatprep.subr.bf16.mxu0 0
        %435 = vmatpush1.bf16.msra.mxu0 0
        %436 = vmatprep.subr.bf16.mxu0 0
        %437 = vmatpush1.bf16.msra.mxu0 0
        %438 = vmatprep.mubr.bf16.mxu0 0
        %439 = vmatmul.mubr.bf16.gmra.mrb[0].mxu0 %v404
        %v440 = vpop.f32.mrb[0].mxu0
        %v441 = vadd.f32 0.0, %v440
        %v442 = vpop.f32.mrb[0].mxu0
        %v443 = vpop.f32.mrb[0].mxu0
        %v444 = vadd.f32 0.0, %v443
        %v445 = vpop.f32.mrb[0].mxu0
        %446 = vdwg.mxu0
        %v447 = vadd.f32 %v356, %v441
        %v448 = vadd.f32 %v359, %v444
        %v449 = vld [vmem:[%s2] sm:$0x1]
        %v451 = vlaneseq
        %v452 = vshrl.u32 %v451, 7
        %v453 = vsub.s32 0, %v452
        %v454 = vrot.slane %v449, %v453
        %v456 = vadd.f32 %v447, %v454
        %v457 = vadd.f32 %v448, %v454
        %458 = vst [vmem:[%s178] sm:$0xff] %v456
        %459 = vst [vmem:[%s178 + $0x8] sm:$0xff] %v457
        %s460 = sand.u32 %s94, 1
        %s461 = scalar_lea.sflag [#allocation4], %s460
        %s462 = sand.u32 %s94, 1
        %s463 = smul.addr %s462, 16
        %s464 = scalar_lea.vmem [#allocation5], %s463
        // Predicated region
        $region37: #{tpu_custom_call.1} parent=31 // pred_check
          %p465 = pneg %p104
        $region38: #{tpu_custom_call.1} parent=31 // pred_check_branch
          %467 = sbr.rel (%p465) target = $region40
        $region39: #{tpu_custom_call.1} parent=31 // pred_region
          %s469 = ssub.s32 256, 256
          %470 = vsyncadd %s461, %s469
          %s471 = smul.addr %s18, 2
          %s472 = smul.addr %s471, 128
          %s473 = scalar_lea.hbm %s3, %s472
          %s474 = sshll.u32 %s464, 4
          %s475 = int_to_ptr.vmem [resolvable:$true] %s474
          %480 = dma.vmem_to_hbm [thread:$0]  %s475, 256, %s473, %s461, 128, 128, 8
        $region40: #{tpu_custom_call.1} parent=31 // pred_fallthru
          _
      $region32: #{tpu_custom_call.1} parent=5 // pred_fallthru
        _
      %p481 = scmp.le.s32.totalorder 2, %s13
      // Predicated region
      $region41: #{tpu_custom_call.1} parent=5 // pred_check
        %p482 = pneg %p481
      $region42: #{tpu_custom_call.1} parent=5 // pred_check_branch
        %484 = sbr.rel (%p482) target = $region44
      $region43: #{tpu_custom_call.1} parent=5 // pred_region
        %s485 = ssub.s32 %s13, 2
        // Predicated region
        $region45: #{tpu_custom_call.1} parent=43 // pred_check
          %p486 = pneg %p110
        $region46: #{tpu_custom_call.1} parent=43 // pred_check_branch
          %488 = sbr.rel (%p486) target = $region48
        $region47: #{tpu_custom_call.1} parent=43 // pred_region
          %s489 = sand.u32 %s95, 1
          %s490 = scalar_lea.sflag [#allocation4], %s489
          %s491 = sand.u32 %s95, 1
          %s492 = smul.addr %s491, 16
          %s493 = scalar_lea.vmem [#allocation5], %s492
          %494 = dma.done %s490, 256
        $region48: #{tpu_custom_call.1} parent=43 // pred_fallthru
          _
      $region44: #{tpu_custom_call.1} parent=5 // pred_fallthru
        _
    $region6: #{tpu_custom_call.1} parent=1 // loop_footer
      %s17 = sadd.s32 1, %s13
    $region7: #{tpu_custom_call.1} parent=1 // loop_footer_branch
      %12 = sbr.rel target = $region3
    $region8: #{tpu_custom_call.1} parent=1 // loop_exit
      _
    %495 = vsyncpa [#allocation3], 1
    %s496 = scalar_lea.sflag [#allocation3], 1
    %497 = vsyncpa %s496, 1
    %498 = vsyncpa [#allocation4], 1
    %s499 = scalar_lea.sflag [#allocation4], 1
    %500 = vsyncpa %s499, 1

// kernel: tpu_custom_call.1
$region0: #{tpu_custom_call.1}
  #allocation0 [shape = 'u32[]', space=smem, size = 0x4, offset = 0x4, fixed_abs, tag = 'smem constant byte address 0x4 - core index']
  #allocation1 [shape = 'u32[144,128]{1,0:T(1,128)}', space=vmem, size = 0x12000, scoped, tag = 'internal scratch']
  %s0 = inlined_call_operand.vmem [shape: bf16[2,18,64], index: 0, kind: input, shape index: {}]
  %s1 = inlined_call_operand.hbm [shape: bf16[3,64,128], index: 1, kind: input, shape index: {}]
  %s2 = inlined_call_operand.vmem [shape: f32[1,128], index: 2, kind: input, shape index: {}]
  %s3 = inlined_call_operand.hbm [shape: f32[2,16,128], index: 3, kind: output, shape index: {}]
  %s4 = sld [smem:[#allocation0]]
  $region49: #{tpu_custom_call.1} parent=0
    _
  %s6 = ssub.s32 1, %s4
  %s7 = scalar_select 0, %s6, %s4
  $region1: #{tpu_custom_call.1} parent=0
    #allocation2 [shape = 'u8[49152]{0}', space=vmem, size = 0xc000, scoped, tag = 'input window, operand 1, single buffered']
    #allocation3 [shape = 's32[2]{0}', space=sflag, size = 0x8, scoped, tag = 'scoped memory for tpu_custom_call.1']
    #allocation4 [shape = 's32[2]{0}', space=sflag, size = 0x8, scoped, tag = 'scoped memory for tpu_custom_call.1']
    #allocation5 [shape = 'u8[16384]{0}', space=vmem, size = 0x4000, scoped, tag = 'output window, operand 0']
    %8 = vsyncpa [#allocation3], 0
    %9 = vsyncpa [#allocation4], 0
    %s10 = scalar_lea.sflag [#allocation4], 1
    %11 = vsyncpa %s10, 0
    loop: start=0, step=1, limit=4
    $region2: #{tpu_custom_call.1} parent=1 // loop_pre_header
      _
    $region3: #{tpu_custom_call.1} parent=1 // loop_header
      %s13 = sphi 0, %s17
      %p14 = scmp.ge.s32.totalorder %s13, 4
      %s23 = sphi 0, %s25
      %s26 = sphi 0, %s23
      %s27 = sphi 0, %s26
      %s43 = sphi 0, %s27
      %s47 = sphi 0, %s47
      %s49 = sphi 0, %s47
      %s50 = sphi 0, %s49
      %s64 = sphi 0, %s50
      %s68 = sphi 0, %s68
      %s70 = sphi 0, %s68
      %s71 = sphi 0, %s70
      %s85 = sphi 0, %s71
      %s91 = sphi 0, %s93
      %s94 = sphi 0, %s91
      %s95 = sphi 0, %s94
      %s111 = sphi 0, %s95
    $region4: #{tpu_custom_call.1} parent=1 // loop_header_branch
      %16 = sbr.rel (%p14) target = $region8
    $region5: #{tpu_custom_call.1} parent=1 // loop_body
      %s18 = ssub.s32 %s13, 1
      %s19 = ssub.s32 %s13, 2
      %s20 = sadd.s32 %s13, 1
      %s21 = ssub.s32 %s13, %s20
      %p22 = scmp.eq.s32.totalorder %s21, 0
      %s24 = sadd.s32 %s23, 1
      %s25 = scalar_select %p22, %s23, %s24
      %p28 = pneg %p22
      %p29 = scmp.eq.s32.totalorder %s13, 1
      %p30 = por %p28, %p29
      %p31 = scmp.ne.s32.totalorder %s23, %s26
      %p32 = scmp.eq.s32.totalorder %s13, 0
      %p33 = por %p31, %p32
      %p34 = scmp.ne.s32.totalorder %s23, %s26
      %p35 = scmp.eq.s32.totalorder %s18, 1
      %p36 = por %p34, %p35
      %p37 = scmp.ne.s32.totalorder %s26, %s27
      %p38 = scmp.eq.s32.totalorder %s18, 0
      %p39 = por %p37, %p38
      %p40 = scmp.ne.s32.totalorder %s26, %s27
      %p41 = scmp.eq.s32.totalorder %s19, 1
      %p42 = por %p40, %p41
      %p44 = scmp.ne.s32.totalorder %s27, %s43
      %p45 = scmp.eq.s32.totalorder %s19, 0
      %p46 = por %p44, %p45
      %s48 = sadd.s32 %s47, 1
      %p51 = scmp.eq.s32.totalorder %s13, 1
      %p52 = scmp.ne.s32.totalorder %s47, %s49
      %p53 = scmp.eq.s32.totalorder %s13, 0
      %p54 = por %p52, %p53
      %p55 = scmp.ne.s32.totalorder %s47, %s49
      %p56 = scmp.eq.s32.totalorder %s18, 1
      %p57 = por %p55, %p56
      %p58 = scmp.ne.s32.totalorder %s49, %s50
      %p59 = scmp.eq.s32.totalorder %s18, 0
      %p60 = por %p58, %p59
      %p61 = scmp.ne.s32.totalorder %s49, %s50
      %p62 = scmp.eq.s32.totalorder %s19, 1
      %p63 = por %p61, %p62
      %p65 = scmp.ne.s32.totalorder %s50, %s64
      %p66 = scmp.eq.s32.totalorder %s19, 0
      %p67 = por %p65, %p66
      %s69 = sadd.s32 %s68, 1
      %p72 = scmp.eq.s32.totalorder %s13, 1
      %p73 = scmp.ne.s32.totalorder %s68, %s70
      %p74 = scmp.eq.s32.totalorder %s13, 0
      %p75 = por %p73, %p74
      %p76 = scmp.ne.s32.totalorder %s68, %s70
      %p77 = scmp.eq.s32.totalorder %s18, 1
      %p78 = por %p76, %p77
      %p79 = scmp.ne.s32.totalorder %s70, %s71
      %p80 = scmp.eq.s32.totalorder %s18, 0
      %p81 = por %p79, %p80
      %p82 = scmp.ne.s32.totalorder %s70, %s71
      %p83 = scmp.eq.s32.totalorder %s19, 1
      %p84 = por %p82, %p83
      %p86 = scmp.ne.s32.totalorder %s71, %s85
      %p87 = scmp.eq.s32.totalorder %s19, 0
      %p88 = por %p86, %p87
      %s89 = ssub.s32 %s13, %s20
      %p90 = scmp.eq.s32.totalorder %s89, 0
      %s92 = sadd.s32 %s91, 1
      %s93 = scalar_select %p90, %s91, %s92
      %p96 = pneg %p90
      %p97 = scmp.eq.s32.totalorder %s13, 1
      %p98 = por %p96, %p97
      %p99 = scmp.ne.s32.totalorder %s91, %s94
      %p100 = scmp.eq.s32.totalorder %s13, 0
      %p101 = por %p99, %p100
      %p102 = scmp.ne.s32.totalorder %s91, %s94
      %p103 = scmp.eq.s32.totalorder %s18, 1
      %p104 = por %p102, %p103
      %p105 = scmp.ne.s32.totalorder %s94, %s95
      %p106 = scmp.eq.s32.totalorder %s18, 0
      %p107 = por %p105, %p106
      %p108 = scmp.ne.s32.totalorder %s94, %s95
      %p109 = scmp.eq.s32.totalorder %s19, 1
      %p110 = por %p108, %p109
      %p112 = scmp.ne.s32.totalorder %s95, %s111
      %p113 = scmp.eq.s32.totalorder %s19, 0
      %p114 = por %p112, %p113
      %p115 = scmp.le.s32.totalorder 1, %s13
      %p116 = scmp.lt.s32.totalorder %s13, 3
      %p117 = pnand %p115, %p116
      %p118 = pneg %p117
      // Predicated region
      $region9: #{tpu_custom_call.1} parent=5 // pred_check
        _
      $region10: #{tpu_custom_call.1} parent=5 // pred_check_branch
        %120 = sbr.rel (%p117) target = $region12
      $region11: #{tpu_custom_call.1} parent=5 // pred_region
        %s121 = ssub.s32 %s13, 1
        // Predicated region
        $region13: #{tpu_custom_call.1} parent=11 // pred_check
          %p122 = pneg %p60
        $region14: #{tpu_custom_call.1} parent=11 // pred_check_branch
          %124 = sbr.rel (%p122) target = $region16
        $region15: #{tpu_custom_call.1} parent=11 // pred_region
          %s126 = ssub.s32 1536, 1536
          %127 = vsyncadd [#allocation3], %s126
          %s128 = sshll.u32 [#allocation2], 4
          %s129 = int_to_ptr.vmem [resolvable:$true] %s128
          %134 = dma.hbm_to_vmem [thread:$0]  %s1, 1536, %s129, [#allocation3], 64, 64, 4
        $region16: #{tpu_custom_call.1} parent=11 // pred_fallthru
          _
        // Predicated region
        $region17: #{tpu_custom_call.1} parent=11 // pred_check
          %p135 = pneg %p81
        $region18: #{tpu_custom_call.1} parent=11 // pred_check_branch
          %137 = sbr.rel (%p135) target = $region20
        $region19: #{tpu_custom_call.1} parent=11 // pred_region
          _
        $region20: #{tpu_custom_call.1} parent=11 // pred_fallthru
          _
      $region12: #{tpu_custom_call.1} parent=5 // pred_fallthru
        _
      %p138 = scmp.lt.s32.totalorder %s13, 2
      // Predicated region
      $region21: #{tpu_custom_call.1} parent=5 // pred_check
        %p139 = pneg %p138
      $region22: #{tpu_custom_call.1} parent=5 // pred_check_branch
        %141 = sbr.rel (%p139) target = $region24
      $region23: #{tpu_custom_call.1} parent=5 // pred_region
        // Predicated region
        $region25: #{tpu_custom_call.1} parent=23 // pred_check
          %p142 = pneg %p33
        $region26: #{tpu_custom_call.1} parent=23 // pred_check_branch
          %144 = sbr.rel (%p142) target = $region28
        $region27: #{tpu_custom_call.1} parent=23 // pred_region
          %p145 = scmp.lt.s32.totalorder %s13, 1
          %s146 = scalar_select %p145, %s13, 1
          %s147 = smul.addr %s146, 3
          %s148 = smul.addr %s147, 4
          %s149 = scalar_lea.vmem %s0, %s148
        $region28: #{tpu_custom_call.1} parent=23 // pred_fallthru
          _
      $region24: #{tpu_custom_call.1} parent=5 // pred_fallthru
        _
      %p150 = scmp.le.s32.totalorder 1, %s13
      %p151 = scmp.lt.s32.totalorder %s13, 3
      %p152 = pnand %p150, %p151
      %p153 = pneg %p152
      // Predicated region
      $region29: #{tpu_custom_call.1} parent=5 // pred_check
        _
      $region30: #{tpu_custom_call.1} parent=5 // pred_check_branch
        %155 = sbr.rel (%p152) target = $region32
      $region31: #{tpu_custom_call.1} parent=5 // pred_region
        %s156 = ssub.s32 %s13, 1
        // Predicated region
        $region33: #{tpu_custom_call.1} parent=31 // pred_check
          %p157 = pneg %p60
        $region34: #{tpu_custom_call.1} parent=31 // pred_check_branch
          %159 = sbr.rel (%p157) target = $region36
        $region35: #{tpu_custom_call.1} parent=31 // pred_region
          %160 = dma.done [#allocation3], 1536
        $region36: #{tpu_custom_call.1} parent=31 // pred_fallthru
          _
        %p161 = scmp.lt.s32.totalorder %s18, 1
        %s162 = scalar_select %p161, %s18, 1
        %s163 = smul.addr %s162, 3
        %s164 = smul.addr %s163, 4
        %s165 = scalar_lea.vmem %s0, %s164
        %p166 = pneg %p39
        %p167 = pneg %p36
        %p168 = pneg %p60
        %p169 = pneg %p57
        %p170 = pneg %p81
        %p171 = pneg %p78
        %p172 = pneg %p107
        %p173 = pneg %p104
        %s174 = sand.u32 %s94, 1
        %s175 = scalar_lea.sflag [#allocation4], %s174
        %s176 = sand.u32 %s94, 1
        %s177 = smul.addr %s176, 16
        %s178 = scalar_lea.vmem [#allocation5], %s177
        %p179 = scmp.lt.s32.totalorder %s18, 1
        %s180 = scalar_select %p179, %s18, 1
        %s181 = smul.addr %s180, 3
        %s182 = smul.addr %s181, 4
        %s183 = scalar_lea.vmem %s0, %s182
        %v185 = vld [vmem:[%s183] sm:$0xf]
        %v186 = vld [vmem:[%s183 + $0x4] sm:$0xf]
        %v187 = vld [vmem:[#allocation2] sm:$0xf]
        %v188 = vld [vmem:[#allocation2 + $0x4] sm:$0xf]
        %v189 = vld [vmem:[#allocation2 + $0x8] sm:$0xf]
        %v190 = vld [vmem:[#allocation2 + $0xc] sm:$0xf]
        %v191 = vld [vmem:[#allocation2 + $0x10] sm:$0xf]
        %v192 = vld [vmem:[#allocation2 + $0x14] sm:$0xf]
        %v193 = vld [vmem:[#allocation2 + $0x18] sm:$0xf]
        %v194 = vld [vmem:[#allocation2 + $0x1c] sm:$0xf]
        %v195 = vld [vmem:[%s183 + $0x8] sm:$0x1]
        %s196 = scalar_lea.vmem [#allocation2], 32
        %v197 = vld [vmem:[%s196] sm:$0xf]
        %v198 = vld [vmem:[%s196 + $0x4] sm:$0xf]
        %v199 = vld [vmem:[%s196 + $0x8] sm:$0xf]
        %v200 = vld [vmem:[%s196 + $0xc] sm:$0xf]
        %v201 = vld [vmem:[%s196 + $0x10] sm:$0xf]
        %v202 = vld [vmem:[%s196 + $0x14] sm:$0xf]
        %v203 = vld [vmem:[%s196 + $0x18] sm:$0xf]
        %v204 = vld [vmem:[%s196 + $0x1c] sm:$0xf]
        %v208 = vunpack.c.l.b16 %v185
        %v209 = vunpack.c.l.b16 %v186
        %v210 = vunpack.c.l.b16 %v195
        %v211 = vpack.c.b16 %v209, %v208
        %v212 = vpack.c.b16 %v210, %v210
        %vm213 = vsmask.f32 7424
        %v215 = vshrl.u32 %v211, 16
        %v217 = vshll.u32 %v211, 16
        %v219 = vrot.slane %v217, 1
        %v220 = vor.u32 %v215, %v219
        %v222 = vshll.u32 %v212, 16
        %v224 = vrot.slane %v222, 1
        %v225 = vsel %vm213, %v220, %v224
        %v234 = vunpack.c.l.b16 %v197
        %v235 = vunpack.c.l.b16 %v198
        %v236 = vunpack.c.l.b16 %v199
        %v237 = vunpack.c.l.b16 %v200
        %v238 = vunpack.c.l.b16 %v201
        %v239 = vunpack.c.l.b16 %v202
        %v240 = vunpack.c.l.b16 %v203
        %v241 = vunpack.c.l.b16 %v204
        %v242 = vpack.c.b16 %v235, %v234
        %v243 = vpack.c.b16 %v237, %v236
        %v244 = vpack.c.b16 %v239, %v238
        %v245 = vpack.c.b16 %v241, %v240
        %vm250 = vcmask 523264
        %v252 = vsel %vm250, %v225, 0
        %254 = vmatprep.subr.bf16.mxu0 0
        %255 = vmatpush1.bf16.msra.mxu0 %v242
        %256 = vmatprep.subr.bf16.mxu0 0
        %257 = vmatpush1.bf16.msra.mxu0 %v243
        %258 = vmatprep.subr.bf16.mxu0 0
        %259 = vmatpush1.bf16.msra.mxu0 %v244
        %260 = vmatprep.subr.bf16.mxu0 0
        %261 = vmatpush1.bf16.msra.mxu0 %v245
        %262 = vmatprep.subr.bf16.mxu0 0
        %263 = vmatpush1.bf16.msra.mxu0 0
        %264 = vmatprep.subr.bf16.mxu0 0
        %265 = vmatpush1.bf16.msra.mxu0 0
        %266 = vmatprep.subr.bf16.mxu0 0
        %267 = vmatpush1.bf16.msra.mxu0 0
        %268 = vmatprep.subr.bf16.mxu0 0
        %269 = vmatpush1.bf16.msra.mxu0 0
        %270 = vmatprep.subr.bf16.mxu0 0
        %271 = vmatpush1.bf16.msra.mxu0 0
        %272 = vmatprep.subr.bf16.mxu0 0
        %273 = vmatpush1.bf16.msra.mxu0 0
        %274 = vmatprep.subr.bf16.mxu0 0
        %275 = vmatpush1.bf16.msra.mxu0 0
        %276 = vmatprep.subr.bf16.mxu0 0
        %277 = vmatpush1.bf16.msra.mxu0 0
        %278 = vmatprep.subr.bf16.mxu0 0
        %279 = vmatpush1.bf16.msra.mxu0 0
        %280 = vmatprep.subr.bf16.mxu0 0
        %281 = vmatpush1.bf16.msra.mxu0 0
        %282 = vmatprep.subr.bf16.mxu0 0
        %283 = vmatpush1.bf16.msra.mxu0 0
        %284 = vmatprep.subr.bf16.mxu0 0
        %285 = vmatpush1.bf16.msra.mxu0 0
        %286 = vmatprep.mubr.bf16.mxu0 0
        %287 = vmatmul.mubr.bf16.gmra.mrb[0].mxu0 %v252
        %v288 = vpop.f32.mrb[0].mxu0
        %v289 = vadd.f32 0.0, %v288
        %v290 = vpop.f32.mrb[0].mxu0
        %v291 = vpop.f32.mrb[0].mxu0
        %v292 = vadd.f32 0.0, %v291
        %v293 = vpop.f32.mrb[0].mxu0
        %294 = vdwg.mxu0
        %v303 = vunpack.c.l.b16 %v187
        %v304 = vunpack.c.l.b16 %v188
        %v305 = vunpack.c.l.b16 %v189
        %v306 = vunpack.c.l.b16 %v190
        %v307 = vunpack.c.l.b16 %v191
        %v308 = vunpack.c.l.b16 %v192
        %v309 = vunpack.c.l.b16 %v193
        %v310 = vunpack.c.l.b16 %v194
        %v311 = vpack.c.b16 %v304, %v303
        %v312 = vpack.c.b16 %v306, %v305
        %v313 = vpack.c.b16 %v308, %v307
        %v314 = vpack.c.b16 %v310, %v309
        %v319 = vsel %vm250, %v211, 0
        %321 = vmatprep.subr.bf16.mxu0 0
        %322 = vmatpush1.bf16.msra.mxu0 %v311
        %323 = vmatprep.subr.bf16.mxu0 0
        %324 = vmatpush1.bf16.msra.mxu0 %v312
        %325 = vmatprep.subr.bf16.mxu0 0
        %326 = vmatpush1.bf16.msra.mxu0 %v313
        %327 = vmatprep.subr.bf16.mxu0 0
        %328 = vmatpush1.bf16.msra.mxu0 %v314
        %329 = vmatprep.subr.bf16.mxu0 0
        %330 = vmatpush1.bf16.msra.mxu0 0
        %331 = vmatprep.subr.bf16.mxu0 0
        %332 = vmatpush1.bf16.msra.mxu0 0
        %333 = vmatprep.subr.bf16.mxu0 0
        %334 = vmatpush1.bf16.msra.mxu0 0
        %335 = vmatprep.subr.bf16.mxu0 0
        %336 = vmatpush1.bf16.msra.mxu0 0
        %337 = vmatprep.subr.bf16.mxu0 0
        %338 = vmatpush1.bf16.msra.mxu0 0
        %339 = vmatprep.subr.bf16.mxu0 0
        %340 = vmatpush1.bf16.msra.mxu0 0
        %341 = vmatprep.subr.bf16.mxu0 0
        %342 = vmatpush1.bf16.msra.mxu0 0
        %343 = vmatprep.subr.bf16.mxu0 0
        %344 = vmatpush1.bf16.msra.mxu0 0
        %345 = vmatprep.subr.bf16.mxu0 0
        %346 = vmatpush1.bf16.msra.mxu0 0
        %347 = vmatprep.subr.bf16.mxu0 0
        %348 = vmatpush1.bf16.msra.mxu0 0
        %349 = vmatprep.subr.bf16.mxu0 0
        %350 = vmatpush1.bf16.msra.mxu0 0
        %351 = vmatprep.subr.bf16.mxu0 0
        %352 = vmatpush1.bf16.msra.mxu0 0
        %353 = vmatprep.mubr.bf16.mxu0 0
        %354 = vmatmul.mubr.bf16.gmra.mrb[0].mxu0 %v319
        %v355 = vpop.f32.mrb[0].mxu0
        %v356 = vadd.f32 %v289, %v355
        %v357 = vpop.f32.mrb[0].mxu0
        %v358 = vpop.f32.mrb[0].mxu0
        %v359 = vadd.f32 %v292, %v358
        %v360 = vpop.f32.mrb[0].mxu0
        %361 = vdwg.mxu0
        %v362 = vld [vmem:[%s183] sm:$0xe]
        %s363 = scalar_lea.vmem [#allocation2], 64
        %v364 = vld [vmem:[%s363] sm:$0xf]
        %v365 = vld [vmem:[%s363 + $0x4] sm:$0xf]
        %v366 = vld [vmem:[%s363 + $0x8] sm:$0xf]
        %v367 = vld [vmem:[%s363 + $0xc] sm:$0xf]
        %v368 = vld [vmem:[%s363 + $0x10] sm:$0xf]
        %v369 = vld [vmem:[%s363 + $0x14] sm:$0xf]
        %v370 = vld [vmem:[%s363 + $0x18] sm:$0xf]
        %v371 = vld [vmem:[%s363 + $0x1c] sm:$0xf]
        %v373 = vunpack.c.l.b16 %v362
        %v374 = vpack.c.b16 %v209, %v373
        %vm375 = vcmask 1046528
        %v376 = vrot.slane %v374, 1
        %v377 = vrot.slane %v212, 1
        %v378 = vsel %vm375, %v376, %v377
        %v387 = vunpack.c.l.b16 %v364
        %v388 = vunpack.c.l.b16 %v365
        %v389 = vunpack.c.l.b16 %v366
        %v390 = vunpack.c.l.b16 %v367
        %v391 = vunpack.c.l.b16 %v368
        %v392 = vunpack.c.l.b16 %v369
        %v393 = vunpack.c.l.b16 %v370
        %v394 = vunpack.c.l.b16 %v371
        %v395 = vpack.c.b16 %v388, %v387
        %v396 = vpack.c.b16 %v390, %v389
        %v397 = vpack.c.b16 %v392, %v391
        %v398 = vpack.c.b16 %v394, %v393
        %v404 = vsel %vm250, %v378, 0
        %406 = vmatprep.subr.bf16.mxu0 0
        %407 = vmatpush1.bf16.msra.mxu0 %v395
        %408 = vmatprep.subr.bf16.mxu0 0
        %409 = vmatpush1.bf16.msra.mxu0 %v396
        %410 = vmatprep.subr.bf16.mxu0 0
        %411 = vmatpush1.bf16.msra.mxu0 %v397
        %412 = vmatprep.subr.bf16.mxu0 0
        %413 = vmatpush1.bf16.msra.mxu0 %v398
        %414 = vmatprep.subr.bf16.mxu0 0
        %415 = vmatpush1.bf16.msra.mxu0 0
        %416 = vmatprep.subr.bf16.mxu0 0
        %417 = vmatpush1.bf16.msra.mxu0 0
        %418 = vmatprep.subr.bf16.mxu0 0
        %419 = vmatpush1.bf16.msra.mxu0 0
        %420 = vmatprep.subr.bf16.mxu0 0
        %421 = vmatpush1.bf16.msra.mxu0 0
        %422 = vmatprep.subr.bf16.mxu0 0
        %423 = vmatpush1.bf16.msra.mxu0 0
        %424 = vmatprep.subr.bf16.mxu0 0
        %425 = vmatpush1.bf16.msra.mxu0 0
        %426 = vmatprep.subr.bf16.mxu0 0
        %427 = vmatpush1.bf16.msra.mxu0 0
        %428 = vmatprep.subr.bf16.mxu0 0
        %429 = vmatpush1.bf16.msra.mxu0 0
        %430 = vmatprep.subr.bf16.mxu0 0
        %431 = vmatpush1.bf16.msra.mxu0 0
        %432 = vmatprep.subr.bf16.mxu0 0
        %433 = vmatpush1.bf16.msra.mxu0 0
        %434 = vmatprep.subr.bf16.mxu0 0
        %435 = vmatpush1.bf16.msra.mxu0 0
        %436 = vmatprep.subr.bf16.mxu0 0
        %437 = vmatpush1.bf16.msra.mxu0 0
        %438 = vmatprep.mubr.bf16.mxu0 0
        %439 = vmatmul.mubr.bf16.gmra.mrb[0].mxu0 %v404
        %v440 = vpop.f32.mrb[0].mxu0
        %v441 = vadd.f32 0.0, %v440
        %v442 = vpop.f32.mrb[0].mxu0
        %v443 = vpop.f32.mrb[0].mxu0
        %v444 = vadd.f32 0.0, %v443
        %v445 = vpop.f32.mrb[0].mxu0
        %446 = vdwg.mxu0
        %v447 = vadd.f32 %v356, %v441
        %v448 = vadd.f32 %v359, %v444
        %v449 = vld [vmem:[%s2] sm:$0x1]
        %v451 = vlaneseq
        %v452 = vshrl.u32 %v451, 7
        %v453 = vsub.s32 0, %v452
        %v454 = vrot.slane %v449, %v453
        %v456 = vadd.f32 %v447, %v454
        %v457 = vadd.f32 %v448, %v454
        %458 = vst [vmem:[%s178] sm:$0xff] %v456
        %459 = vst [vmem:[%s178 + $0x8] sm:$0xff] %v457
        %s460 = sand.u32 %s94, 1
        %s461 = scalar_lea.sflag [#allocation4], %s460
        %s462 = sand.u32 %s94, 1
        %s463 = smul.addr %s462, 16
        %s464 = scalar_lea.vmem [#allocation5], %s463
        // Predicated region
        $region37: #{tpu_custom_call.1} parent=31 // pred_check
          %p465 = pneg %p104
        $region38: #{tpu_custom_call.1} parent=31 // pred_check_branch
          %467 = sbr.rel (%p465) target = $region40
        $region39: #{tpu_custom_call.1} parent=31 // pred_region
          %s469 = ssub.s32 256, 256
          %470 = vsyncadd %s461, %s469
          %s471 = smul.addr %s18, 2
          %s472 = smul.addr %s471, 128
          %s473 = scalar_lea.hbm %s3, %s472
          %s474 = sshll.u32 %s464, 4
          %s475 = int_to_ptr.vmem [resolvable:$true] %s474
          %480 = dma.vmem_to_hbm [thread:$0]  %s475, 256, %s473, %s461, 128, 128, 8
        $region40: #{tpu_custom_call.1} parent=31 // pred_fallthru
          _
      $region32: #{tpu_custom_call.1} parent=5 // pred_fallthru
        _
      %p481 = scmp.le.s32.totalorder 2, %s13
      // Predicated region
      $region41: #{tpu_custom_call.1} parent=5 // pred_check
        %p482 = pneg %p481
      $region42: #{tpu_custom_call.1} parent=5 // pred_check_branch
        %484 = sbr.rel (%p482) target = $region44
      $region43: #{tpu_custom_call.1} parent=5 // pred_region
        %s485 = ssub.s32 %s13, 2
        // Predicated region
        $region45: #{tpu_custom_call.1} parent=43 // pred_check
          %p486 = pneg %p110
        $region46: #{tpu_custom_call.1} parent=43 // pred_check_branch
          %488 = sbr.rel (%p486) target = $region48
        $region47: #{tpu_custom_call.1} parent=43 // pred_region
          %s489 = sand.u32 %s95, 1
          %s490 = scalar_lea.sflag [#allocation4], %s489
          %s491 = sand.u32 %s95, 1
          %s492 = smul.addr %s491, 16
          %s493 = scalar_lea.vmem [#allocation5], %s492
          %494 = dma.done %s490, 256
        $region48: #{tpu_custom_call.1} parent=43 // pred_fallthru
          _
      $region44: #{tpu_custom_call.1} parent=5 // pred_fallthru
        _
    $region6: #{tpu_custom_call.1} parent=1 // loop_footer
      %s17 = sadd.s32 1, %s13
    $region7: #{tpu_custom_call.1} parent=1 // loop_footer_branch
      %12 = sbr.rel target = $region3
    $region8: #{tpu_custom_call.1} parent=1 // loop_exit
      _
    %495 = vsyncpa [#allocation3], 1
    %s496 = scalar_lea.sflag [#allocation3], 1
    %497 = vsyncpa %s496, 1
    %498 = vsyncpa [#allocation4], 1
    %s499 = scalar_lea.sflag [#allocation4], 1
    %500 = vsyncpa %s499, 1

</llo_original>
